<compile_context>
chip_gen: v5e
topology: v5e:2x2
jax: 0.10.0
libtpu: 0.0.40
codegen_flags: <defaults>
</compile_context>

<pallas_src>
import math

import jax
import jax.numpy as jnp
from jax.experimental import pallas as pl
from jax.experimental.pallas import tpu as pltpu


def make_dct_basis_T(N: int, dtype=jnp.float32) -> jnp.ndarray:
    """Deterministic orthonormal DCT-II basis, returned transposed (BT)."""
    n = jnp.arange(N, dtype=jnp.float32).reshape(1, -1)   # (1, N)
    k = jnp.arange(N, dtype=jnp.float32).reshape(-1, 1)   # (N, 1)
    B = math.sqrt(2.0 / N) * jnp.cos(math.pi * (n + 0.5) * k / N)  # (N, N)
    B = B.at[0].divide(math.sqrt(2.0))
    return B.T.astype(dtype)                               # BT, shape (N, N)


def _dct_matmul_kernel(x_ref, bt_ref, o_ref):
    # One row-tile of the (packed) flattened input times the full basis.
    o_ref[...] = jnp.dot(
        x_ref[...], bt_ref[...], preferred_element_type=jnp.float32
    ).astype(o_ref.dtype)


def _round_up(a: int, b: int) -> int:
    return ((a + b - 1) // b) * b


# Pack small-N rows up to this many lanes (multiple of 128; fills v6e's 256-wide MXU,
# stores stay unmasked multiples of 128 on every generation).
_TARGET_LANES = 256
# Conservative per-step VMEM budget valid on v5e / v6e / v7x.
_VMEM_TILE_BUDGET = 24 * 1024 * 1024


def dct1d_forward(x: jnp.ndarray, bt: jnp.ndarray) -> jnp.ndarray:
    """Pallas implementation of DCT1D.forward: reshape(-1, N) @ BT, reshape back."""
    orig_shape = x.shape
    N = orig_shape[-1]
    assert bt.shape == (N, N)

    out_dtype = x.dtype
    basis_dtype = x.dtype if x.dtype == jnp.bfloat16 else jnp.float32
    x_itemsize = jnp.dtype(x.dtype).itemsize
    basis_itemsize = jnp.dtype(basis_dtype).itemsize

    flat = x.reshape(-1, N)            # (M, N), row-major like torch.reshape
    M = flat.shape[0]

    # ---- lane packing for small N: (M, N) -> (M/g, g*N) with block-diag basis.
    if N < 128 and 128 % N == 0:
        g = _TARGET_LANES // N
    else:
        g = 1
    Np = g * N

    if g > 1:
        basis = jnp.kron(jnp.eye(g, dtype=jnp.float32), bt.astype(jnp.float32))
    else:
        basis = bt.astype(jnp.float32)
    basis = basis.astype(basis_dtype)

    # ---- row-tile selection from the VMEM budget (mem-bound: go big).
    # TODO(synk): for very large N (>= ~1024 f32) add a K/N-tiled accumulator grid
    # so the full basis is not held (double-buffered) in VMEM.
    align = 8 if x_itemsize >= 4 else 16          # f32 sublane=8, bf16 packs 16
    Mp = pl.cdiv(M, g)                            # rows of the packed matrix
    basis_bytes = 2 * Np * Np * basis_itemsize    # double-buffered basis
    per_row_bytes = 2 * 2 * Np * x_itemsize       # double-buffered x + out tiles
    avail = _VMEM_TILE_BUDGET - basis_bytes
    if avail > per_row_bytes * align:
        tm = (avail // per_row_bytes) // align * align
    else:
        tm = align
    tm = int(max(align, min(tm, 2048)))
    tm = min(tm, _round_up(Mp, align))
    # Keep >= 2 grid steps where possible so both v7x TensorCores get work.
    if _round_up(Mp, align) > align and tm >= Mp:
        tm = max(align, _round_up(pl.cdiv(Mp, 2), align))

    Mp_pad = _round_up(Mp, tm)
    rows_needed = Mp_pad * g
    if rows_needed != M:
        flat = jnp.pad(flat, ((0, rows_needed - M), (0, 0)))
    packed = flat.reshape(Mp_pad, Np)

    grid = (Mp_pad // tm,)

    vmem_limit = int(
        min(
            max(basis_bytes + per_row_bytes * tm + (2 << 20), 16 * 1024 * 1024),
            40 * 1024 * 1024,   # stays safely under v7x's 64 MiB physical VMEM
        )
    )

    cost = pl.CostEstimate(
        flops=2 * Mp_pad * Np * Np,
        transcendentals=0,
        bytes_accessed=2 * Mp_pad * Np * x_itemsize + Np * Np * basis_itemsize,
    )

    out_packed = pl.pallas_call(
        _dct_matmul_kernel,
        out_shape=jax.ShapeDtypeStruct((Mp_pad, Np), out_dtype),
        grid_spec=pltpu.PrefetchScalarGridSpec(
            num_scalar_prefetch=0,
            grid=grid,
            in_specs=[
                pl.BlockSpec((tm, Np), lambda i: (i, 0)),   # row tile of packed x
                pl.BlockSpec((Np, Np), lambda i: (0, 0)),   # full (block-diag) basis
            ],
            out_specs=pl.BlockSpec((tm, Np), lambda i: (i, 0)),
        ),
        compiler_params=pltpu.CompilerParams(
            dimension_semantics=("parallel",),
            vmem_limit_bytes=vmem_limit,
        ),
        cost_estimate=cost,
    )(packed, basis)

    out_flat = out_packed.reshape(Mp_pad * g, N)
    if rows_needed != M:
        out_flat = out_flat[:M]
    return out_flat.reshape(orig_shape)


if __name__ == "__main__":
    # Small shapes consistent with the module: any (..., N) tensor works.
    B, C, S, N = 2, 4, 16, 32          # x: (2, 4, 16, 32), DCT over last axis
    key = jax.random.PRNGKey(0)
    x = jax.random.normal(key, (B, C, S, N), dtype=jnp.float32)
    bt = make_dct_basis_T(N, dtype=jnp.float32)

    out = jax.block_until_ready(dct1d_forward(x, bt))
    ref = (x.reshape(-1, N) @ bt).reshape(x.shape)
    assert out.shape == x.shape and out.dtype == x.dtype
    assert bool(jnp.allclose(out, ref, atol=1e-4, rtol=1e-4))

    # Exercise the no-packing + ragged-row-count path (N=40, M=15 rows).
    N2 = 40
    x2 = jax.random.normal(jax.random.PRNGKey(1), (3, 5, N2), dtype=jnp.float32)
    bt2 = make_dct_basis_T(N2, dtype=jnp.float32)
    out2 = jax.block_until_ready(dct1d_forward(x2, bt2))
    ref2 = (x2.reshape(-1, N2) @ bt2).reshape(x2.shape)
    assert out2.shape == x2.shape and out2.dtype == x2.dtype
    assert bool(jnp.allclose(out2, ref2, atol=1e-4, rtol=1e-4))

    print("KERNEL_OK")
</pallas_src>

<mosaic_0001>
module attributes {stable_mosaic.version = 11 : i64} {
  func.func @_dct_matmul_kernel(%arg0: i32, %arg1: memref<8x256xf32, #tpu.memory_space<vmem>>, %arg2: memref<256x256xf32, #tpu.memory_space<vmem>>, %arg3: memref<8x256xf32, #tpu.memory_space<vmem>>) attributes {dimension_semantics = [#tpu.dimension_semantics<parallel>], iteration_bounds = array<i64: 2>, scalar_prefetch = 0 : i64, scratch_operands = 0 : i64, tpu.core_type = #tpu.core_type<tc>, window_params = [{transform_indices = @transform_0, window_bounds = array<i64: 8, 256>}, {pipeline_mode = #tpu.pipeline_mode<synchronous>, transform_indices = @transform_1, window_bounds = array<i64: 256, 256>}, {transform_indices = @transform_2, window_bounds = array<i64: 8, 256>}]} {
    %c0 = arith.constant 0 : index
    %c0_0 = arith.constant 0 : index
    %0 = vector.load %arg1[%c0, %c0_0] : memref<8x256xf32, #tpu.memory_space<vmem>>, vector<8x256xf32>
    %c0_1 = arith.constant 0 : index
    %c0_2 = arith.constant 0 : index
    %1 = vector.load %arg2[%c0_1, %c0_2] : memref<256x256xf32, #tpu.memory_space<vmem>>, vector<256x256xf32>
    %cst = arith.constant dense<0.000000e+00> : vector<8x256xf32>
    %2 = tpu.matmul %0, %1, %cst {dimension_numbers = #tpu.dot_dimension_numbers<[1], [0], [0], [1], [0, 0, 1, 1], [], []>} : vector<8x256xf32>, vector<256x256xf32>, vector<8x256xf32> -> vector<8x256xf32>
    %c0_3 = arith.constant 0 : index
    %c0_4 = arith.constant 0 : index
    %3 = vector.load %arg3[%c0_3, %c0_4] : memref<8x256xf32, #tpu.memory_space<vmem>>, vector<8x256xf32>
    tpu.vector_store %arg3[%c0_3, %c0_4], %2 {strides = array<i32>} : memref<8x256xf32, #tpu.memory_space<vmem>>, vector<8x256xf32>,
    return
  }
  func.func @transform_0(%arg0: i32) -> (i32, i32) {
    %c0_i32 = arith.constant 0 : i32
    %c0_i32_0 = arith.constant 0 : i32
    return %arg0, %c0_i32 : i32, i32
  }
  func.func @transform_1(%arg0: i32) -> (i32, i32) {
    %c0_i32 = arith.constant 0 : i32
    %c0_i32_0 = arith.constant 0 : i32
    %c0_i32_1 = arith.constant 0 : i32
    return %c0_i32, %c0_i32_0 : i32, i32
  }
  func.func @transform_2(%arg0: i32) -> (i32, i32) {
    %c0_i32 = arith.constant 0 : i32
    %c0_i32_0 = arith.constant 0 : i32
    return %arg0, %c0_i32 : i32, i32
  }
}

</mosaic_0001>

<llo_original>
// kernel: tpu_custom_call.1
$region0: #{tpu_custom_call.1}
  #allocation0 [shape = 'u32[]', space=smem, size = 0x4, offset = 0x4, fixed_abs, tag = 'smem constant byte address 0x4 - core index']
  #allocation1 [shape = 'u32[72,128]{1,0:T(1,128)}', space=vmem, size = 0x9000, scoped, tag = 'internal scratch']
  %s0 = inlined_call_operand.hbm [shape: f32[16,256], index: 0, kind: input, shape index: {}]
  %s1 = inlined_call_operand.hbm [shape: f32[256,256], index: 1, kind: input, shape index: {}]
  %s2 = inlined_call_operand.hbm [shape: f32[16,256], index: 2, kind: output, shape index: {}]
  %s3 = sld [smem:[#allocation0]]
  $region49: #{tpu_custom_call.1} parent=0
    _
  %s5 = ssub.s32 1, %s3
  %s6 = scalar_select 0, %s5, %s3
  $region1: #{tpu_custom_call.1} parent=0
    #allocation2 [shape = 'u8[16384]{0}', space=vmem, size = 0x4000, scoped, tag = 'input window, operand 0']
    #allocation3 [shape = 's32[2]{0}', space=sflag, size = 0x8, scoped, tag = 'scoped memory for tpu_custom_call.1']
    #allocation4 [shape = 's32[2]{0}', space=sflag, size = 0x8, scoped, tag = 'scoped memory for tpu_custom_call.1']
    #allocation5 [shape = 'u8[262144]{0}', space=vmem, size = 0x40000, scoped, tag = 'input window, operand 1, single buffered']
    #allocation6 [shape = 's32[1]{0}', space=sflag, size = 0x4, scoped, tag = 'scoped memory for tpu_custom_call.1']
    #allocation7 [shape = 'u8[16384]{0}', space=vmem, size = 0x4000, scoped, tag = 'output window, operand 0']
    %7 = vsyncpa [#allocation3], 0
    %s8 = scalar_lea.sflag [#allocation3], 1
    %9 = vsyncpa %s8, 0
    %10 = vsyncpa [#allocation6], 0
    %11 = vsyncpa [#allocation4], 0
    %s12 = scalar_lea.sflag [#allocation4], 1
    %13 = vsyncpa %s12, 0
    loop: start=0, step=1, limit=4
    $region2: #{tpu_custom_call.1} parent=1 // loop_pre_header
      _
    $region3: #{tpu_custom_call.1} parent=1 // loop_header
      %s15 = sphi 0, %s19
      %p16 = scmp.ge.s32.totalorder %s15, 4
      %s25 = sphi 0, %s27
      %s28 = sphi 0, %s25
      %s29 = sphi 0, %s28
      %s45 = sphi 0, %s29
      %s49 = sphi 0, %s49
      %s51 = sphi 0, %s49
      %s52 = sphi 0, %s51
      %s66 = sphi 0, %s52
      %s72 = sphi 0, %s74
      %s75 = sphi 0, %s72
      %s76 = sphi 0, %s75
      %s92 = sphi 0, %s76
    $region4: #{tpu_custom_call.1} parent=1 // loop_header_branch
      %18 = sbr.rel (%p16) target = $region8
    $region5: #{tpu_custom_call.1} parent=1 // loop_body
      %s20 = ssub.s32 %s15, 1
      %s21 = ssub.s32 %s15, 2
      %s22 = sadd.s32 %s15, 1
      %s23 = ssub.s32 %s15, %s22
      %p24 = scmp.eq.s32.totalorder %s23, 0
      %s26 = sadd.s32 %s25, 1
      %s27 = scalar_select %p24, %s25, %s26
      %p30 = pneg %p24
      %p31 = scmp.eq.s32.totalorder %s15, 1
      %p32 = por %p30, %p31
      %p33 = scmp.ne.s32.totalorder %s25, %s28
      %p34 = scmp.eq.s32.totalorder %s15, 0
      %p35 = por %p33, %p34
      %p36 = scmp.ne.s32.totalorder %s25, %s28
      %p37 = scmp.eq.s32.totalorder %s20, 1
      %p38 = por %p36, %p37
      %p39 = scmp.ne.s32.totalorder %s28, %s29
      %p40 = scmp.eq.s32.totalorder %s20, 0
      %p41 = por %p39, %p40
      %p42 = scmp.ne.s32.totalorder %s28, %s29
      %p43 = scmp.eq.s32.totalorder %s21, 1
      %p44 = por %p42, %p43
      %p46 = scmp.ne.s32.totalorder %s29, %s45
      %p47 = scmp.eq.s32.totalorder %s21, 0
      %p48 = por %p46, %p47
      %s50 = sadd.s32 %s49, 1
      %p53 = scmp.eq.s32.totalorder %s15, 1
      %p54 = scmp.ne.s32.totalorder %s49, %s51
      %p55 = scmp.eq.s32.totalorder %s15, 0
      %p56 = por %p54, %p55
      %p57 = scmp.ne.s32.totalorder %s49, %s51
      %p58 = scmp.eq.s32.totalorder %s20, 1
      %p59 = por %p57, %p58
      %p60 = scmp.ne.s32.totalorder %s51, %s52
      %p61 = scmp.eq.s32.totalorder %s20, 0
      %p62 = por %p60, %p61
      %p63 = scmp.ne.s32.totalorder %s51, %s52
      %p64 = scmp.eq.s32.totalorder %s21, 1
      %p65 = por %p63, %p64
      %p67 = scmp.ne.s32.totalorder %s52, %s66
      %p68 = scmp.eq.s32.totalorder %s21, 0
      %p69 = por %p67, %p68
      %s70 = ssub.s32 %s15, %s22
      %p71 = scmp.eq.s32.totalorder %s70, 0
      %s73 = sadd.s32 %s72, 1
      %s74 = scalar_select %p71, %s72, %s73
      %p77 = pneg %p71
      %p78 = scmp.eq.s32.totalorder %s15, 1
      %p79 = por %p77, %p78
      %p80 = scmp.ne.s32.totalorder %s72, %s75
      %p81 = scmp.eq.s32.totalorder %s15, 0
      %p82 = por %p80, %p81
      %p83 = scmp.ne.s32.totalorder %s72, %s75
      %p84 = scmp.eq.s32.totalorder %s20, 1
      %p85 = por %p83, %p84
      %p86 = scmp.ne.s32.totalorder %s75, %s76
      %p87 = scmp.eq.s32.totalorder %s20, 0
      %p88 = por %p86, %p87
      %p89 = scmp.ne.s32.totalorder %s75, %s76
      %p90 = scmp.eq.s32.totalorder %s21, 1
      %p91 = por %p89, %p90
      %p93 = scmp.ne.s32.totalorder %s76, %s92
      %p94 = scmp.eq.s32.totalorder %s21, 0
      %p95 = por %p93, %p94
      %p96 = scmp.le.s32.totalorder 1, %s15
      %p97 = scmp.lt.s32.totalorder %s15, 3
      %p98 = pnand %p96, %p97
      %p99 = pneg %p98
      // Predicated region
      $region9: #{tpu_custom_call.1} parent=5 // pred_check
        _
      $region10: #{tpu_custom_call.1} parent=5 // pred_check_branch
        %101 = sbr.rel (%p98) target = $region12
      $region11: #{tpu_custom_call.1} parent=5 // pred_region
        %s102 = ssub.s32 %s15, 1
        // Predicated region
        $region13: #{tpu_custom_call.1} parent=11 // pred_check
          %p103 = pneg %p62
        $region14: #{tpu_custom_call.1} parent=11 // pred_check_branch
          %105 = sbr.rel (%p103) target = $region16
        $region15: #{tpu_custom_call.1} parent=11 // pred_region
          %107 = vsyncadd [#allocation6], 0
          %s108 = sshll.u32 %s1, 4
          %s109 = int_to_ptr.hbm [resolvable:$true] %s108
          %s110 = sshll.u32 [#allocation5], 4
          %s111 = int_to_ptr.vmem [resolvable:$true] %s110
          %116 = dma.hbm_to_vmem [thread:$0]  %s109, 8192, %s111, [#allocation6], 256, 256, 16
        $region16: #{tpu_custom_call.1} parent=11 // pred_fallthru
          _
      $region12: #{tpu_custom_call.1} parent=5 // pred_fallthru
        _
      %p117 = scmp.lt.s32.totalorder %s15, 2
      // Predicated region
      $region17: #{tpu_custom_call.1} parent=5 // pred_check
        %p118 = pneg %p117
      $region18: #{tpu_custom_call.1} parent=5 // pred_check_branch
        %120 = sbr.rel (%p118) target = $region20
      $region19: #{tpu_custom_call.1} parent=5 // pred_region
        // Predicated region
        $region21: #{tpu_custom_call.1} parent=19 // pred_check
          %p121 = pneg %p35
        $region22: #{tpu_custom_call.1} parent=19 // pred_check_branch
          %123 = sbr.rel (%p121) target = $region24
        $region23: #{tpu_custom_call.1} parent=19 // pred_region
          %s124 = sand.u32 %s25, 1
          %s125 = scalar_lea.sflag [#allocation3], %s124
          %s126 = sand.u32 %s25, 1
          %s127 = smul.addr %s126, 16
          %s128 = scalar_lea.vmem [#allocation2], %s127
          %130 = vsyncadd %s125, 0
          %s131 = smul.addr %s15, 2
          %s132 = smul.addr %s131, 8
          %s133 = scalar_lea.hbm %s0, %s132
          %s135 = sshll.u32 %s133, 4
          %s136 = int_to_ptr.hbm [resolvable:$true] %s135
          %s137 = sshll.u32 %s128, 4
          %s138 = int_to_ptr.vmem [resolvable:$true] %s137
          %140 = dma.hbm_to_vmem [thread:$0]  %s136, 256, %s138, %s125
        $region24: #{tpu_custom_call.1} parent=19 // pred_fallthru
          _
      $region20: #{tpu_custom_call.1} parent=5 // pred_fallthru
        _
      %p141 = scmp.le.s32.totalorder 1, %s15
      %p142 = scmp.lt.s32.totalorder %s15, 3
      %p143 = pnand %p141, %p142
      %p144 = pneg %p143
      // Predicated region
      $region25: #{tpu_custom_call.1} parent=5 // pred_check
        _
      $region26: #{tpu_custom_call.1} parent=5 // pred_check_branch
        %146 = sbr.rel (%p143) target = $region28
      $region27: #{tpu_custom_call.1} parent=5 // pred_region
        %s147 = ssub.s32 %s15, 1
        %s148 = sand.u32 %s28, 1
        %s149 = scalar_lea.sflag [#allocation3], %s148
        %s150 = sand.u32 %s28, 1
        %s151 = smul.addr %s150, 16
        %s152 = scalar_lea.vmem [#allocation2], %s151
        // Predicated region
        $region29: #{tpu_custom_call.1} parent=27 // pred_check
          %p153 = pneg %p41
        $region30: #{tpu_custom_call.1} parent=27 // pred_check_branch
          %155 = sbr.rel (%p153) target = $region32
        $region31: #{tpu_custom_call.1} parent=27 // pred_region
          %157 = dma.done %s149, 256
        $region32: #{tpu_custom_call.1} parent=27 // pred_fallthru
          _
        // Predicated region
        $region33: #{tpu_custom_call.1} parent=27 // pred_check
          %p158 = pneg %p62
        $region34: #{tpu_custom_call.1} parent=27 // pred_check_branch
          %160 = sbr.rel (%p158) target = $region36
        $region35: #{tpu_custom_call.1} parent=27 // pred_region
          %162 = dma.done [#allocation6], 8192
        $region36: #{tpu_custom_call.1} parent=27 // pred_fallthru
          _
        %s163 = sand.u32 %s28, 1
        %s164 = scalar_lea.sflag [#allocation3], %s163
        %s165 = sand.u32 %s28, 1
        %s166 = smul.addr %s165, 16
        %s167 = scalar_lea.vmem [#allocation2], %s166
        %p168 = pneg %p41
        %p169 = pneg %p38
        %p170 = pneg %p62
        %p171 = pneg %p59
        %p172 = pneg %p88
        %p173 = pneg %p85
        %s174 = sand.u32 %s75, 1
        %s175 = scalar_lea.sflag [#allocation4], %s174
        %s176 = sand.u32 %s75, 1
        %s177 = smul.addr %s176, 16
        %s178 = scalar_lea.vmem [#allocation7], %s177
        %v179 = vld [vmem:[%s152] sm:$0xff]
        %v180 = vld [vmem:[%s152 + $0x8] sm:$0xff]
        %v181 = vld [vmem:[#allocation5] sm:$0xff]
        %v182 = vld [vmem:[#allocation5 + $0x8] sm:$0xff]
        %v183 = vld [vmem:[#allocation5 + $0x10] sm:$0xff]
        %v184 = vld [vmem:[#allocation5 + $0x18] sm:$0xff]
        %v185 = vld [vmem:[#allocation5 + $0x20] sm:$0xff]
        %v186 = vld [vmem:[#allocation5 + $0x28] sm:$0xff]
        %v187 = vld [vmem:[#allocation5 + $0x30] sm:$0xff]
        %v188 = vld [vmem:[#allocation5 + $0x38] sm:$0xff]
        %v189 = vld [vmem:[#allocation5 + $0x40] sm:$0xff]
        %v190 = vld [vmem:[#allocation5 + $0x48] sm:$0xff]
        %v191 = vld [vmem:[#allocation5 + $0x50] sm:$0xff]
        %v192 = vld [vmem:[#allocation5 + $0x58] sm:$0xff]
        %v193 = vld [vmem:[#allocation5 + $0x60] sm:$0xff]
        %v194 = vld [vmem:[#allocation5 + $0x68] sm:$0xff]
        %v195 = vld [vmem:[#allocation5 + $0x70] sm:$0xff]
        %v196 = vld [vmem:[#allocation5 + $0x78] sm:$0xff]
        %v197 = vld [vmem:[#allocation5 + $0x80] sm:$0xff]
        %v198 = vld [vmem:[#allocation5 + $0x88] sm:$0xff]
        %v199 = vld [vmem:[#allocation5 + $0x90] sm:$0xff]
        %v200 = vld [vmem:[#allocation5 + $0x98] sm:$0xff]
        %v201 = vld [vmem:[#allocation5 + $0xa0] sm:$0xff]
        %v202 = vld [vmem:[#allocation5 + $0xa8] sm:$0xff]
        %v203 = vld [vmem:[#allocation5 + $0xb0] sm:$0xff]
        %v204 = vld [vmem:[#allocation5 + $0xb8] sm:$0xff]
        %v205 = vld [vmem:[#allocation5 + $0xc0] sm:$0xff]
        %v206 = vld [vmem:[#allocation5 + $0xc8] sm:$0xff]
        %v207 = vld [vmem:[#allocation5 + $0xd0] sm:$0xff]
        %v208 = vld [vmem:[#allocation5 + $0xd8] sm:$0xff]
        %v209 = vld [vmem:[#allocation5 + $0xe0] sm:$0xff]
        %v210 = vld [vmem:[#allocation5 + $0xe8] sm:$0xff]
        %v211 = vld [vmem:[#allocation5 + $0xf0] sm:$0xff]
        %v212 = vld [vmem:[#allocation5 + $0xf8] sm:$0xff]
        %v213 = vld [vmem:[#allocation5 + $0x100] sm:$0xff]
        %v214 = vld [vmem:[#allocation5 + $0x108] sm:$0xff]
        %v215 = vld [vmem:[#allocation5 + $0x110] sm:$0xff]
        %v216 = vld [vmem:[#allocation5 + $0x118] sm:$0xff]
        %v217 = vld [vmem:[#allocation5 + $0x120] sm:$0xff]
        %v218 = vld [vmem:[#allocation5 + $0x128] sm:$0xff]
        %v219 = vld [vmem:[#allocation5 + $0x130] sm:$0xff]
        %v220 = vld [vmem:[#allocation5 + $0x138] sm:$0xff]
        %v221 = vld [vmem:[#allocation5 + $0x140] sm:$0xff]
        %v222 = vld [vmem:[#allocation5 + $0x148] sm:$0xff]
        %v223 = vld [vmem:[#allocation5 + $0x150] sm:$0xff]
        %v224 = vld [vmem:[#allocation5 + $0x158] sm:$0xff]
        %v225 = vld [vmem:[#allocation5 + $0x160] sm:$0xff]
        %v226 = vld [vmem:[#allocation5 + $0x168] sm:$0xff]
        %v227 = vld [vmem:[#allocation5 + $0x170] sm:$0xff]
        %v228 = vld [vmem:[#allocation5 + $0x178] sm:$0xff]
        %v229 = vld [vmem:[#allocation5 + $0x180] sm:$0xff]
        %v230 = vld [vmem:[#allocation5 + $0x188] sm:$0xff]
        %v231 = vld [vmem:[#allocation5 + $0x190] sm:$0xff]
        %v232 = vld [vmem:[#allocation5 + $0x198] sm:$0xff]
        %v233 = vld [vmem:[#allocation5 + $0x1a0] sm:$0xff]
        %v234 = vld [vmem:[#allocation5 + $0x1a8] sm:$0xff]
        %v235 = vld [vmem:[#allocation5 + $0x1b0] sm:$0xff]
        %v236 = vld [vmem:[#allocation5 + $0x1b8] sm:$0xff]
        %v237 = vld [vmem:[#allocation5 + $0x1c0] sm:$0xff]
        %v238 = vld [vmem:[#allocation5 + $0x1c8] sm:$0xff]
        %v239 = vld [vmem:[#allocation5 + $0x1d0] sm:$0xff]
        %v240 = vld [vmem:[#allocation5 + $0x1d8] sm:$0xff]
        %v241 = vld [vmem:[#allocation5 + $0x1e0] sm:$0xff]
        %v242 = vld [vmem:[#allocation5 + $0x1e8] sm:$0xff]
        %v243 = vld [vmem:[#allocation5 + $0x1f0] sm:$0xff]
        %v244 = vld [vmem:[#allocation5 + $0x1f8] sm:$0xff]
        %245 = vmatpush.msra.mxu0 %v211
        %246 = vmatpush.msra.mxu0 %v209
        %247 = vmatpush.msra.mxu0 %v207
        %248 = vmatpush.msra.mxu0 %v205
        %249 = vmatpush.msra.mxu0 %v203
        %250 = vmatpush.msra.mxu0 %v201
        %251 = vmatpush.msra.mxu0 %v199
        %252 = vmatpush.msra.mxu0 %v197
        %253 = vmatpush.msra.mxu0 %v195
        %254 = vmatpush.msra.mxu0 %v193
        %255 = vmatpush.msra.mxu0 %v191
        %256 = vmatpush.msra.mxu0 %v189
        %257 = vmatpush.msra.mxu0 %v187
        %258 = vmatpush.msra.mxu0 %v185
        %259 = vmatpush.msra.mxu0 %v183
        %260 = vmatpush.msra.mxu0 %v181
        %261 = vmatmul.f32.gmra.mxu0 %v179
        %v262 = vpop.f32.mrf.mxu0
        %v263 = vadd.f32 0.0, %v262
        %264 = vdwg.mxu0
        %265 = vmatpush.msra.mxu0 %v243
        %266 = vmatpush.msra.mxu0 %v241
        %267 = vmatpush.msra.mxu0 %v239
        %268 = vmatpush.msra.mxu0 %v237
        %269 = vmatpush.msra.mxu0 %v235
        %270 = vmatpush.msra.mxu0 %v233
        %271 = vmatpush.msra.mxu0 %v231
        %272 = vmatpush.msra.mxu0 %v229
        %273 = vmatpush.msra.mxu0 %v227
        %274 = vmatpush.msra.mxu0 %v225
        %275 = vmatpush.msra.mxu0 %v223
        %276 = vmatpush.msra.mxu0 %v221
        %277 = vmatpush.msra.mxu0 %v219
        %278 = vmatpush.msra.mxu0 %v217
        %279 = vmatpush.msra.mxu0 %v215
        %280 = vmatpush.msra.mxu0 %v213
        %281 = vmatmul.f32.gmra.mxu0 %v180
        %v282 = vpop.f32.mrf.mxu0
        %v283 = vadd.f32 %v263, %v282
        %284 = vdwg.mxu0
        %285 = vmatpush.msra.mxu0 %v212
        %286 = vmatpush.msra.mxu0 %v210
        %287 = vmatpush.msra.mxu0 %v208
        %288 = vmatpush.msra.mxu0 %v206
        %289 = vmatpush.msra.mxu0 %v204
        %290 = vmatpush.msra.mxu0 %v202
        %291 = vmatpush.msra.mxu0 %v200
        %292 = vmatpush.msra.mxu0 %v198
        %293 = vmatpush.msra.mxu0 %v196
        %294 = vmatpush.msra.mxu0 %v194
        %295 = vmatpush.msra.mxu0 %v192
        %296 = vmatpush.msra.mxu0 %v190
        %297 = vmatpush.msra.mxu0 %v188
        %298 = vmatpush.msra.mxu0 %v186
        %299 = vmatpush.msra.mxu0 %v184
        %300 = vmatpush.msra.mxu0 %v182
        %301 = vmatmul.f32.gmra.mxu0 %v179
        %v302 = vpop.f32.mrf.mxu0
        %v303 = vadd.f32 0.0, %v302
        %304 = vdwg.mxu0
        %305 = vmatpush.msra.mxu0 %v244
        %306 = vmatpush.msra.mxu0 %v242
        %307 = vmatpush.msra.mxu0 %v240
        %308 = vmatpush.msra.mxu0 %v238
        %309 = vmatpush.msra.mxu0 %v236
        %310 = vmatpush.msra.mxu0 %v234
        %311 = vmatpush.msra.mxu0 %v232
        %312 = vmatpush.msra.mxu0 %v230
        %313 = vmatpush.msra.mxu0 %v228
        %314 = vmatpush.msra.mxu0 %v226
        %315 = vmatpush.msra.mxu0 %v224
        %316 = vmatpush.msra.mxu0 %v222
        %317 = vmatpush.msra.mxu0 %v220
        %318 = vmatpush.msra.mxu0 %v218
        %319 = vmatpush.msra.mxu0 %v216
        %320 = vmatpush.msra.mxu0 %v214
        %321 = vmatmul.f32.gmra.mxu0 %v180
        %v322 = vpop.f32.mrf.mxu0
        %v323 = vadd.f32 %v303, %v322
        %324 = vdwg.mxu0
        %325 = vst [vmem:[%s178] sm:$0xff] %v283
        %326 = vst [vmem:[%s178 + $0x8] sm:$0xff] %v323
        %s327 = sand.u32 %s75, 1
        %s328 = scalar_lea.sflag [#allocation4], %s327
        %s329 = sand.u32 %s75, 1
        %s330 = smul.addr %s329, 16
        %s331 = scalar_lea.vmem [#allocation7], %s330
        // Predicated region
        $region37: #{tpu_custom_call.1} parent=27 // pred_check
          %p332 = pneg %p85
        $region38: #{tpu_custom_call.1} parent=27 // pred_check_branch
          %334 = sbr.rel (%p332) target = $region40
        $region39: #{tpu_custom_call.1} parent=27 // pred_region
          %336 = vsyncadd %s328, 0
          %s337 = smul.addr %s20, 2
          %s338 = smul.addr %s337, 8
          %s339 = scalar_lea.hbm %s2, %s338
          %s341 = sshll.u32 %s331, 4
          %s342 = int_to_ptr.vmem [resolvable:$true] %s341
          %s343 = sshll.u32 %s339, 4
          %s344 = int_to_ptr.hbm [resolvable:$true] %s343
          %346 = dma.vmem_to_hbm [thread:$0]  %s342, 256, %s344, %s328
        $region40: #{tpu_custom_call.1} parent=27 // pred_fallthru
          _
      $region28: #{tpu_custom_call.1} parent=5 // pred_fallthru
        _
      %p347 = scmp.le.s32.totalorder 2, %s15
      // Predicated region
      $region41: #{tpu_custom_call.1} parent=5 // pred_check
        %p348 = pneg %p347
      $region42: #{tpu_custom_call.1} parent=5 // pred_check_branch
        %350 = sbr.rel (%p348) target = $region44
      $region43: #{tpu_custom_call.1} parent=5 // pred_region
        %s351 = ssub.s32 %s15, 2
        // Predicated region
        $region45: #{tpu_custom_call.1} parent=43 // pred_check
          %p352 = pneg %p91
        $region46: #{tpu_custom_call.1} parent=43 // pred_check_branch
          %354 = sbr.rel (%p352) target = $region48
        $region47: #{tpu_custom_call.1} parent=43 // pred_region
          %s355 = sand.u32 %s76, 1
          %s356 = scalar_lea.sflag [#allocation4], %s355
          %s357 = sand.u32 %s76, 1
          %s358 = smul.addr %s357, 16
          %s359 = scalar_lea.vmem [#allocation7], %s358
          %361 = dma.done %s356, 256
        $region48: #{tpu_custom_call.1} parent=43 // pred_fallthru
          _
      $region44: #{tpu_custom_call.1} parent=5 // pred_fallthru
        _
    $region6: #{tpu_custom_call.1} parent=1 // loop_footer
      %s19 = sadd.s32 1, %s15
    $region7: #{tpu_custom_call.1} parent=1 // loop_footer_branch
      %14 = sbr.rel target = $region3
    $region8: #{tpu_custom_call.1} parent=1 // loop_exit
      _
    %362 = vsyncpa [#allocation3], 1
    %s363 = scalar_lea.sflag [#allocation3], 1
    %364 = vsyncpa %s363, 1
    %365 = vsyncpa [#allocation6], 1
    %366 = vsyncpa [#allocation4], 1
    %s367 = scalar_lea.sflag [#allocation4], 1
    %368 = vsyncpa %s367, 1

</llo_original>
